<compile_context>
chip_gen: v7x
topology: tpu7x:2x2x1
jax: 0.10.0
libtpu: 0.0.40
codegen_flags: <defaults>
</compile_context>

<pallas_src>
import jax
import jax.numpy as jnp
from jax.experimental import pallas as pl
from jax.experimental.pallas import tpu as pltpu


# ----------------------------------------------------------------------------
# Pallas kernel (3x3 same-padding conv via im2col + single MXU dot)
# ----------------------------------------------------------------------------
def _make_conv_kernel(*, TH, W, Cin, relu, has_res, res_scale):
    def kernel(*refs):
        if has_res:
            x_ref, w_ref, b_ref, r_ref, o_ref = refs
        else:
            x_ref, w_ref, b_ref, o_ref = refs
            r_ref = None

        # x_ref block: (1, 1, TH+2, W+2, Cin) bf16 (pre-halo'd row window)
        xt = x_ref[...][0, 0]                               # (TH+2, W+2, Cin)

        # im2col: fold the 9 taps into the contraction dimension.
        parts = []
        for ky in range(3):
            for kx in range(3):
                parts.append(xt[ky:ky + TH, kx:kx + W, :].reshape(TH * W, Cin))
        patch = jnp.concatenate(parts, axis=-1)             # (TH*W, 9*Cin) bf16

        # Single MXU matmul, f32 accumulation.
        acc = jnp.dot(patch, w_ref[...],
                      preferred_element_type=jnp.float32)   # (TH*W, CT)
        acc = acc + b_ref[...]                              # (1, CT) bias
        if relu:
            acc = jnp.maximum(acc, 0.0)

        out = acc.reshape(o_ref.shape)                      # (1, TH, W, CT)
        if has_res:
            out = out + res_scale * r_ref[...]              # fused skip add(s)
        o_ref[...] = out.astype(o_ref.dtype)

    return kernel


# ----------------------------------------------------------------------------
# Conv wrapper: row tiling with halo + Cout tiling
# ----------------------------------------------------------------------------
def conv3x3(x, w, b, *, relu=False, residual=None, residual_scale=1.0,
            out_dtype=jnp.float32, th=8, cout_tile=256):
    """x: (N, H, W, Cin); w: (3, 3, Cin, Cout); b: (Cout,).

    Optional `residual` (N, H, W, Cout) is added (scaled) in the epilogue.
    """
    N, H, W, Cin = x.shape
    Cout = w.shape[-1]

    # Pad tiny channel counts (RGB=3) up to 8 for a friendlier layout.
    if Cin % 8 != 0:
        cpad = 8 - Cin % 8
        x = jnp.pad(x, ((0, 0), (0, 0), (0, 0), (0, cpad)))
        w = jnp.pad(w, ((0, 0), (0, 0), (0, cpad), (0, 0)))
        Cin += cpad

    TH = min(th, H)
    nt = -(-H // TH)                 # cdiv
    Hpt = nt * TH

    CT = min(cout_tile, Cout)
    assert Cout % CT == 0
    nc = Cout // CT

    # bf16 MXU operands; weight folded to (9*Cin, Cout) matching the im2col order.
    xb = x.astype(jnp.bfloat16)
    wk = w.reshape(9 * Cin, Cout).astype(jnp.bfloat16)
    bk = b.reshape(1, Cout).astype(jnp.float32)

    # "same" zero padding + bottom padding to a multiple of TH, then build
    # non-overlapping pre-halo'd row windows: (N, nt, TH+2, W+2, Cin).
    xb = jnp.pad(xb, ((0, 0), (0, Hpt - H), (0, 0), (0, 0)))
    xp = jnp.pad(xb, ((0, 0), (1, 1), (1, 1), (0, 0)))
    windows = jnp.stack([xp[:, t * TH:t * TH + TH + 2] for t in range(nt)],
                        axis=1)

    args = [windows, wk, bk]
    in_specs = [
        pl.BlockSpec((1, 1, TH + 2, W + 2, Cin),
                     lambda j, n, t: (n, t, 0, 0, 0)),
        pl.BlockSpec((9 * Cin, CT), lambda j, n, t: (0, j)),
        pl.BlockSpec((1, CT), lambda j, n, t: (0, j)),
    ]

    has_res = residual is not None
    if has_res:
        r = residual.astype(jnp.float32)
        if Hpt > H:
            r = jnp.pad(r, ((0, 0), (0, Hpt - H), (0, 0), (0, 0)))
        args.append(r)
        in_specs.append(
            pl.BlockSpec((1, TH, W, CT), lambda j, n, t: (n, t, 0, j)))

    kernel = _make_conv_kernel(TH=TH, W=W, Cin=Cin, relu=relu,
                               has_res=has_res, res_scale=residual_scale)

    out = pl.pallas_call(
        kernel,
        out_shape=jax.ShapeDtypeStruct((N, Hpt, W, Cout), out_dtype),
        grid=(nc, N, nt),            # Cout slab outermost -> weights stay resident
        in_specs=in_specs,
        out_specs=pl.BlockSpec((1, TH, W, CT), lambda j, n, t: (n, t, 0, j)),
        compiler_params=pltpu.CompilerParams(
            dimension_semantics=("parallel", "parallel", "parallel")),
    )(*args)

    return out[:, :H] if Hpt > H else out


# ----------------------------------------------------------------------------
# Parameter construction (deterministic, synthetic)
# ----------------------------------------------------------------------------
def _conv_params(key, cin, cout, scale=0.05):
    kw, kb = jax.random.split(key)
    w = scale * jax.random.normal(kw, (3, 3, cin, cout), jnp.float32)
    b = scale * jax.random.normal(kb, (cout,), jnp.float32)
    return {"w": w, "b": b}


def init_params(key):
    ks = jax.random.split(key, 6)
    return {
        # Cloth_features(3, 512, 64)
        "cloth_c1": _conv_params(ks[0], 3, 64),
        "cloth_c2": _conv_params(ks[1], 64, 512),
        # Person_paring_features(3, 256, 64) -- shared for head & lower
        "person_c1": _conv_params(ks[2], 3, 64),
        "person_c2": _conv_params(ks[3], 64, 256),
        # ResidualBlock(512, 512)
        "res_c1": _conv_params(ks[4], 512, 512),
        "res_c2": _conv_params(ks[5], 512, 512),
    }


# ----------------------------------------------------------------------------
# Bottleneckt forward
# ----------------------------------------------------------------------------
def cloth_features(p, x):
    # conv1 output is a pure intermediate -> keep it bf16 (halves HBM traffic).
    h = conv3x3(x, p["cloth_c1"]["w"], p["cloth_c1"]["b"], relu=True,
                out_dtype=jnp.bfloat16)
    return conv3x3(h, p["cloth_c2"]["w"], p["cloth_c2"]["b"], relu=True)


def person_paring_features(p, x):
    h = conv3x3(x, p["person_c1"]["w"], p["person_c1"]["b"], relu=True,
                out_dtype=jnp.bfloat16)
    return conv3x3(h, p["person_c2"]["w"], p["person_c2"]["b"], relu=True)


def bottleneckt_forward(params, cloth, head, lower, t_parse, c_mask, tps=True):
    c_features = cloth_features(params, cloth)                 # (N,H,W,512) f32
    head_features = person_paring_features(params, head)       # (N,H,W,256) f32
    lower_features = person_paring_features(params, lower)     # (N,H,W,256) f32

    # ResidualBlock(512,512): res_c_fea = x + conv2(relu(conv1(x)))
    # TODO(synk): Warping / TPS_Affine (thin-plate-spline grid_sample driven by
    # t_parse & c_mask) is not defined in the provided snippet; warp is an
    # identity passthrough of res_c_fea.  Hence
    #   c_features + warp == 2*x + conv2(relu(conv1(x)))
    # and both the residual skip add and the warp add are fused into conv2's
    # epilogue (residual_scale=2), avoiding two HBM round trips on (N,H,W,512).
    del t_parse, c_mask, tps
    h = conv3x3(c_features, params["res_c1"]["w"], params["res_c1"]["b"],
                relu=True, out_dtype=jnp.bfloat16)
    c_plus_warp = conv3x3(h, params["res_c2"]["w"], params["res_c2"]["b"],
                          relu=False, residual=c_features, residual_scale=2.0)

    # torch.cat((head, lower, cloth), dim=1) in NCHW == channel concat (NHWC: -1)
    return jnp.concatenate((head_features, lower_features, c_plus_warp),
                           axis=-1)


# ----------------------------------------------------------------------------
# Demo
# ----------------------------------------------------------------------------
if __name__ == "__main__":
    key = jax.random.PRNGKey(0)
    kp, k1, k2, k3, k4, k5 = jax.random.split(key, 6)

    N, H, W = 2, 16, 16
    params = init_params(kp)

    cloth = jax.random.normal(k1, (N, H, W, 3), jnp.float32)
    head = jax.random.normal(k2, (N, H, W, 3), jnp.float32)
    lower = jax.random.normal(k3, (N, H, W, 3), jnp.float32)
    t_parse = jax.random.normal(k4, (N, H, W, 20), jnp.float32)   # unused (TPS)
    c_mask = jax.random.normal(k5, (N, H, W, 1), jnp.float32)     # unused (TPS)

    out = bottleneckt_forward(params, cloth, head, lower, t_parse, c_mask)
    out = jax.block_until_ready(out)

    assert out.shape == (N, H, W, 256 + 256 + 512), out.shape
    assert out.dtype == jnp.float32
    assert bool(jnp.all(jnp.isfinite(out)))
    print("KERNEL_OK")
</pallas_src>

<mosaic_0001>
module attributes {stable_mosaic.version = 11 : i64} {
  func.func @kernel(%arg0: i32, %arg1: i32, %arg2: i32, %arg3: memref<1x1x10x18x8xbf16, #tpu.memory_space<vmem>>, %arg4: memref<72x64xbf16, #tpu.memory_space<vmem>>, %arg5: memref<1x64xf32, #tpu.memory_space<vmem>>, %arg6: memref<1x8x16x64xbf16, #tpu.memory_space<vmem>>) attributes {dimension_semantics = [#tpu.dimension_semantics<parallel>, #tpu.dimension_semantics<parallel>, #tpu.dimension_semantics<parallel>], iteration_bounds = array<i64: 1, 2, 2>, scalar_prefetch = 0 : i64, scratch_operands = 0 : i64, tpu.core_type = #tpu.core_type<tc>, window_params = [{transform_indices = @transform_0, window_bounds = array<i64: 1, 1, 10, 18, 8>}, {transform_indices = @transform_1, window_bounds = array<i64: 72, 64>}, {transform_indices = @transform_2, window_bounds = array<i64: 1, 64>}, {transform_indices = @transform_3, window_bounds = array<i64: 1, 8, 16, 64>}]} {
    %c0 = arith.constant 0 : index
    %c0_0 = arith.constant 0 : index
    %c0_1 = arith.constant 0 : index
    %c0_2 = arith.constant 0 : index
    %c0_3 = arith.constant 0 : index
    %0 = vector.load %arg3[%c0, %c0_0, %c0_1, %c0_2, %c0_3] : memref<1x1x10x18x8xbf16, #tpu.memory_space<vmem>>, vector<1x1x10x18x8xbf16>
    %1 = vector.shape_cast %0 : vector<1x1x10x18x8xbf16> to vector<10x18x8xbf16>
    %2 = vector.extract_strided_slice %1 {offsets = [0, 0, 0], sizes = [8, 16, 8], strides = [1, 1, 1]} : vector<10x18x8xbf16> to vector<8x16x8xbf16>
    %3 = vector.shape_cast %2 : vector<8x16x8xbf16> to vector<128x8xbf16>
    %4 = vector.extract_strided_slice %1 {offsets = [0, 1, 0], sizes = [8, 16, 8], strides = [1, 1, 1]} : vector<10x18x8xbf16> to vector<8x16x8xbf16>
    %5 = vector.shape_cast %4 : vector<8x16x8xbf16> to vector<128x8xbf16>
    %6 = vector.extract_strided_slice %1 {offsets = [0, 2, 0], sizes = [8, 16, 8], strides = [1, 1, 1]} : vector<10x18x8xbf16> to vector<8x16x8xbf16>
    %7 = vector.shape_cast %6 : vector<8x16x8xbf16> to vector<128x8xbf16>
    %8 = vector.extract_strided_slice %1 {offsets = [1, 0, 0], sizes = [8, 16, 8], strides = [1, 1, 1]} : vector<10x18x8xbf16> to vector<8x16x8xbf16>
    %9 = vector.shape_cast %8 : vector<8x16x8xbf16> to vector<128x8xbf16>
    %10 = vector.extract_strided_slice %1 {offsets = [1, 1, 0], sizes = [8, 16, 8], strides = [1, 1, 1]} : vector<10x18x8xbf16> to vector<8x16x8xbf16>
    %11 = vector.shape_cast %10 : vector<8x16x8xbf16> to vector<128x8xbf16>
    %12 = vector.extract_strided_slice %1 {offsets = [1, 2, 0], sizes = [8, 16, 8], strides = [1, 1, 1]} : vector<10x18x8xbf16> to vector<8x16x8xbf16>
    %13 = vector.shape_cast %12 : vector<8x16x8xbf16> to vector<128x8xbf16>
    %14 = vector.extract_strided_slice %1 {offsets = [2, 0, 0], sizes = [8, 16, 8], strides = [1, 1, 1]} : vector<10x18x8xbf16> to vector<8x16x8xbf16>
    %15 = vector.shape_cast %14 : vector<8x16x8xbf16> to vector<128x8xbf16>
    %16 = vector.extract_strided_slice %1 {offsets = [2, 1, 0], sizes = [8, 16, 8], strides = [1, 1, 1]} : vector<10x18x8xbf16> to vector<8x16x8xbf16>
    %17 = vector.shape_cast %16 : vector<8x16x8xbf16> to vector<128x8xbf16>
    %18 = vector.extract_strided_slice %1 {offsets = [2, 2, 0], sizes = [8, 16, 8], strides = [1, 1, 1]} : vector<10x18x8xbf16> to vector<8x16x8xbf16>
    %19 = vector.shape_cast %18 : vector<8x16x8xbf16> to vector<128x8xbf16>
    %20 = tpu.concatenate %3, %5, %7, %9, %11, %13, %15, %17, %19 in 1 : vector<128x8xbf16>, vector<128x8xbf16>, vector<128x8xbf16>, vector<128x8xbf16>, vector<128x8xbf16>, vector<128x8xbf16>, vector<128x8xbf16>, vector<128x8xbf16>, vector<128x8xbf16> -> vector<128x72xbf16>
    %c0_4 = arith.constant 0 : index
    %c0_5 = arith.constant 0 : index
    %21 = vector.load %arg4[%c0_4, %c0_5] : memref<72x64xbf16, #tpu.memory_space<vmem>>, vector<72x64xbf16>
    %cst = arith.constant dense<0.000000e+00> : vector<128x64xf32>
    %22 = tpu.matmul %20, %21, %cst {dimension_numbers = #tpu.dot_dimension_numbers<[1], [0], [0], [1], [0, 0, 1, 1], [], []>} : vector<128x72xbf16>, vector<72x64xbf16>, vector<128x64xf32> -> vector<128x64xf32>
    %c0_6 = arith.constant 0 : index
    %c0_7 = arith.constant 0 : index
    %23 = vector.load %arg5[%c0_6, %c0_7] : memref<1x64xf32, #tpu.memory_space<vmem>>, vector<1x64xf32>
    %24 = vector.broadcast %23 : vector<1x64xf32> to vector<128x64xf32>
    %25 = arith.addf %22, %24 : vector<128x64xf32>
    %cst_8 = arith.constant 0.000000e+00 : f32
    %26 = vector.broadcast %cst_8 : f32 to vector<128x64xf32>
    %27 = arith.maximumf %25, %26 : vector<128x64xf32>
    %28 = vector.shape_cast %27 : vector<128x64xf32> to vector<1x8x16x64xf32>
    %29 = arith.truncf %28 : vector<1x8x16x64xf32> to vector<1x8x16x64xbf16>
    %c0_9 = arith.constant 0 : index
    %c0_10 = arith.constant 0 : index
    %c0_11 = arith.constant 0 : index
    %c0_12 = arith.constant 0 : index
    %30 = vector.load %arg6[%c0_9, %c0_10, %c0_11, %c0_12] : memref<1x8x16x64xbf16, #tpu.memory_space<vmem>>, vector<1x8x16x64xbf16>
    tpu.vector_store %arg6[%c0_9, %c0_10, %c0_11, %c0_12], %29 {strides = array<i32>} : memref<1x8x16x64xbf16, #tpu.memory_space<vmem>>, vector<1x8x16x64xbf16>,
    return
  }
  func.func @transform_0(%arg0: i32, %arg1: i32, %arg2: i32) -> (i32, i32, i32, i32, i32) {
    %c0_i32 = arith.constant 0 : i32
    %c0_i32_0 = arith.constant 0 : i32
    %c0_i32_1 = arith.constant 0 : i32
    %c0_i32_2 = arith.constant 0 : i32
    return %arg1, %arg2, %c0_i32, %c0_i32_0, %c0_i32_1 : i32, i32, i32, i32, i32
  }
  func.func @transform_1(%arg0: i32, %arg1: i32, %arg2: i32) -> (i32, i32) {
    %c0_i32 = arith.constant 0 : i32
    %c0_i32_0 = arith.constant 0 : i32
    return %c0_i32, %arg0 : i32, i32
  }
  func.func @transform_2(%arg0: i32, %arg1: i32, %arg2: i32) -> (i32, i32) {
    %c0_i32 = arith.constant 0 : i32
    %c0_i32_0 = arith.constant 0 : i32
    return %c0_i32, %arg0 : i32, i32
  }
  func.func @transform_3(%arg0: i32, %arg1: i32, %arg2: i32) -> (i32, i32, i32, i32) {
    %c0_i32 = arith.constant 0 : i32
    %c0_i32_0 = arith.constant 0 : i32
    return %arg1, %arg2, %c0_i32, %arg0 : i32, i32, i32, i32
  }
}

</mosaic_0001>

<llo_original>
// kernel: tpu_custom_call.1
$region0: #{tpu_custom_call.1}
  #allocation0 [shape = 'u32[]', space=smem, size = 0x4, offset = 0x4, fixed_abs, tag = 'smem constant byte address 0x4 - core index']
  #allocation1 [shape = 'u32[144,128]{1,0:T(1,128)}', space=vmem, size = 0x12000, scoped, tag = 'internal scratch']
  %s0 = inlined_call_operand.vmem [shape: bf16[2,2,10,18,8], index: 0, kind: input, shape index: {}]
  %s1 = inlined_call_operand.vmem [shape: bf16[72,64], index: 1, kind: input, shape index: {}]
  %s2 = inlined_call_operand.vmem [shape: f32[1,64], index: 2, kind: input, shape index: {}]
  %s3 = inlined_call_operand.hbm [shape: bf16[2,16,16,64], index: 3, kind: output, shape index: {}]
  %s4 = sld [smem:[#allocation0]]
  $region45: #{tpu_custom_call.1} parent=0
    _
  %s6 = ssub.s32 1, %s4
  %s7 = scalar_select 0, %s6, %s4
  $region1: #{tpu_custom_call.1} parent=0
    #allocation2 [shape = 'u8[65536]{0}', space=vmem, size = 0x10000, scoped, tag = 'output window, operand 0']
    #allocation3 [shape = 's32[2]{0}', space=sflag, size = 0x8, scoped, tag = 'scoped memory for tpu_custom_call.1']
    %8 = vsyncpa [#allocation3], 0
    %s9 = scalar_lea.sflag [#allocation3], 1
    %10 = vsyncpa %s9, 0
    loop: start=0, step=1, limit=6
    $region2: #{tpu_custom_call.1} parent=1 // loop_pre_header
      _
    $region3: #{tpu_custom_call.1} parent=1 // loop_header
      %s12 = sphi 0, %s16
      %p13 = scmp.ge.s32.totalorder %s12, 6
      %s19 = sphi 0, %s38
      %s20 = sphi 0, %s34
      %s21 = sphi 0, %s30
      %s22 = sphi 0, %s19
      %s23 = sphi 0, %s20
      %s24 = sphi 0, %s21
      %s25 = sphi 0, %s22
      %s26 = sphi 0, %s23
      %s27 = sphi 0, %s24
      %s43 = sphi 0, %s45
      %s46 = sphi 0, %s43
      %s47 = sphi 0, %s46
      %s63 = sphi 0, %s47
      %s69 = sphi 0, %s71
      %s72 = sphi 0, %s69
      %s73 = sphi 0, %s72
      %s89 = sphi 0, %s73
      %s95 = sphi 0, %s97
      %s98 = sphi 0, %s95
      %s99 = sphi 0, %s98
      %s115 = sphi 0, %s99
      %s125 = sphi 0, %s127
      %s128 = sphi 0, %s125
      %s129 = sphi 0, %s128
      %s145 = sphi 0, %s129
    $region4: #{tpu_custom_call.1} parent=1 // loop_header_branch
      %15 = sbr.rel (%p13) target = $region8
    $region5: #{tpu_custom_call.1} parent=1 // loop_body
      %s17 = ssub.s32 %s12, 1
      %s18 = ssub.s32 %s12, 2
      %s28 = sadd.s32 1, %s21
      %p29 = scmp.ge.s32.totalorder %s28, 2
      %s30 = scalar_select %p29, 0, %s28
      %s31 = sadd.s32 1, %s20
      %s32 = scalar_select %p29, %s31, %s20
      %p33 = scmp.ge.s32.totalorder %s32, 2
      %s34 = scalar_select %p33, 0, %s32
      %s35 = sadd.s32 1, %s19
      %s36 = scalar_select %p33, %s35, %s19
      %p37 = scmp.ge.s32.totalorder %s36, 1
      %s38 = scalar_select %p37, 0, %s36
      %s39 = ssub.s32 %s20, %s34
      %s40 = ssub.s32 %s21, %s30
      %s41 = sor.u32 %s39, %s40
      %p42 = scmp.eq.s32.totalorder %s41, 0
      %s44 = sadd.s32 %s43, 1
      %s45 = scalar_select %p42, %s43, %s44
      %p48 = pneg %p42
      %p49 = scmp.eq.s32.totalorder %s12, 3
      %p50 = por %p48, %p49
      %p51 = scmp.ne.s32.totalorder %s43, %s46
      %p52 = scmp.eq.s32.totalorder %s12, 0
      %p53 = por %p51, %p52
      %p54 = scmp.ne.s32.totalorder %s43, %s46
      %p55 = scmp.eq.s32.totalorder %s17, 3
      %p56 = por %p54, %p55
      %p57 = scmp.ne.s32.totalorder %s46, %s47
      %p58 = scmp.eq.s32.totalorder %s17, 0
      %p59 = por %p57, %p58
      %p60 = scmp.ne.s32.totalorder %s46, %s47
      %p61 = scmp.eq.s32.totalorder %s18, 3
      %p62 = por %p60, %p61
      %p64 = scmp.ne.s32.totalorder %s47, %s63
      %p65 = scmp.eq.s32.totalorder %s18, 0
      %p66 = por %p64, %p65
      %s67 = ssub.s32 %s19, %s38
      %p68 = scmp.eq.s32.totalorder %s67, 0
      %s70 = sadd.s32 %s69, 1
      %s71 = scalar_select %p68, %s69, %s70
      %p74 = pneg %p68
      %p75 = scmp.eq.s32.totalorder %s12, 3
      %p76 = por %p74, %p75
      %p77 = scmp.ne.s32.totalorder %s69, %s72
      %p78 = scmp.eq.s32.totalorder %s12, 0
      %p79 = por %p77, %p78
      %p80 = scmp.ne.s32.totalorder %s69, %s72
      %p81 = scmp.eq.s32.totalorder %s17, 3
      %p82 = por %p80, %p81
      %p83 = scmp.ne.s32.totalorder %s72, %s73
      %p84 = scmp.eq.s32.totalorder %s17, 0
      %p85 = por %p83, %p84
      %p86 = scmp.ne.s32.totalorder %s72, %s73
      %p87 = scmp.eq.s32.totalorder %s18, 3
      %p88 = por %p86, %p87
      %p90 = scmp.ne.s32.totalorder %s73, %s89
      %p91 = scmp.eq.s32.totalorder %s18, 0
      %p92 = por %p90, %p91
      %s93 = ssub.s32 %s19, %s38
      %p94 = scmp.eq.s32.totalorder %s93, 0
      %s96 = sadd.s32 %s95, 1
      %s97 = scalar_select %p94, %s95, %s96
      %p100 = pneg %p94
      %p101 = scmp.eq.s32.totalorder %s12, 3
      %p102 = por %p100, %p101
      %p103 = scmp.ne.s32.totalorder %s95, %s98
      %p104 = scmp.eq.s32.totalorder %s12, 0
      %p105 = por %p103, %p104
      %p106 = scmp.ne.s32.totalorder %s95, %s98
      %p107 = scmp.eq.s32.totalorder %s17, 3
      %p108 = por %p106, %p107
      %p109 = scmp.ne.s32.totalorder %s98, %s99
      %p110 = scmp.eq.s32.totalorder %s17, 0
      %p111 = por %p109, %p110
      %p112 = scmp.ne.s32.totalorder %s98, %s99
      %p113 = scmp.eq.s32.totalorder %s18, 3
      %p114 = por %p112, %p113
      %p116 = scmp.ne.s32.totalorder %s99, %s115
      %p117 = scmp.eq.s32.totalorder %s18, 0
      %p118 = por %p116, %p117
      %s119 = ssub.s32 %s20, %s34
      %s120 = ssub.s32 %s21, %s30
      %s121 = sor.u32 %s119, %s120
      %s122 = ssub.s32 %s19, %s38
      %s123 = sor.u32 %s121, %s122
      %p124 = scmp.eq.s32.totalorder %s123, 0
      %s126 = sadd.s32 %s125, 1
      %s127 = scalar_select %p124, %s125, %s126
      %p130 = pneg %p124
      %p131 = scmp.eq.s32.totalorder %s12, 3
      %p132 = por %p130, %p131
      %p133 = scmp.ne.s32.totalorder %s125, %s128
      %p134 = scmp.eq.s32.totalorder %s12, 0
      %p135 = por %p133, %p134
      %p136 = scmp.ne.s32.totalorder %s125, %s128
      %p137 = scmp.eq.s32.totalorder %s17, 3
      %p138 = por %p136, %p137
      %p139 = scmp.ne.s32.totalorder %s128, %s129
      %p140 = scmp.eq.s32.totalorder %s17, 0
      %p141 = por %p139, %p140
      %p142 = scmp.ne.s32.totalorder %s128, %s129
      %p143 = scmp.eq.s32.totalorder %s18, 3
      %p144 = por %p142, %p143
      %p146 = scmp.ne.s32.totalorder %s129, %s145
      %p147 = scmp.eq.s32.totalorder %s18, 0
      %p148 = por %p146, %p147
      %p149 = scmp.le.s32.totalorder 1, %s12
      %p150 = scmp.lt.s32.totalorder %s12, 5
      %p151 = pnand %p149, %p150
      %p152 = pneg %p151
      // Predicated region
      $region9: #{tpu_custom_call.1} parent=5 // pred_check
        _
      $region10: #{tpu_custom_call.1} parent=5 // pred_check_branch
        %154 = sbr.rel (%p151) target = $region12
      $region11: #{tpu_custom_call.1} parent=5 // pred_region
        %s155 = ssub.s32 %s12, 1
        // Predicated region
        $region13: #{tpu_custom_call.1} parent=11 // pred_check
          %p156 = pneg %p85
        $region14: #{tpu_custom_call.1} parent=11 // pred_check_branch
          %158 = sbr.rel (%p156) target = $region16
        $region15: #{tpu_custom_call.1} parent=11 // pred_region
          %p159 = scmp.lt.s32.totalorder %s22, 0
          %s160 = scalar_select %p159, %s22, 0
          %s161 = smul.addr %s160, 4
          %s162 = scalar_lea.vmem %s1, %s161
        $region16: #{tpu_custom_call.1} parent=11 // pred_fallthru
          _
        // Predicated region
        $region17: #{tpu_custom_call.1} parent=11 // pred_check
          %p163 = pneg %p111
        $region18: #{tpu_custom_call.1} parent=11 // pred_check_branch
          %165 = sbr.rel (%p163) target = $region20
        $region19: #{tpu_custom_call.1} parent=11 // pred_region
          %p166 = scmp.lt.s32.totalorder %s22, 0
          %s167 = scalar_select %p166, %s22, 0
          %s168 = scalar_lea.vmem %s2, %s167
        $region20: #{tpu_custom_call.1} parent=11 // pred_fallthru
          _
      $region12: #{tpu_custom_call.1} parent=5 // pred_fallthru
        _
      %p169 = scmp.lt.s32.totalorder %s12, 4
      // Predicated region
      $region21: #{tpu_custom_call.1} parent=5 // pred_check
        %p170 = pneg %p169
      $region22: #{tpu_custom_call.1} parent=5 // pred_check_branch
        %172 = sbr.rel (%p170) target = $region24
      $region23: #{tpu_custom_call.1} parent=5 // pred_region
        // Predicated region
        $region25: #{tpu_custom_call.1} parent=23 // pred_check
          %p173 = pneg %p53
        $region26: #{tpu_custom_call.1} parent=23 // pred_check_branch
          %175 = sbr.rel (%p173) target = $region28
        $region27: #{tpu_custom_call.1} parent=23 // pred_region
          %p176 = scmp.lt.s32.totalorder %s20, 1
          %s177 = scalar_select %p176, %s20, 1
          %p178 = scmp.lt.s32.totalorder %s21, 1
          %s179 = scalar_select %p178, %s21, 1
          %s180 = smul.addr %s179, 30
          %s181 = smul.addr %s177, 60
          %s182 = sadd.s32 %s180, %s181
          %s183 = smul.addr %s182, 4
          %s184 = scalar_lea.vmem %s0, %s183
        $region28: #{tpu_custom_call.1} parent=23 // pred_fallthru
          _
      $region24: #{tpu_custom_call.1} parent=5 // pred_fallthru
        _
      %p185 = scmp.le.s32.totalorder 1, %s12
      %p186 = scmp.lt.s32.totalorder %s12, 5
      %p187 = pnand %p185, %p186
      %p188 = pneg %p187
      // Predicated region
      $region29: #{tpu_custom_call.1} parent=5 // pred_check
        _
      $region30: #{tpu_custom_call.1} parent=5 // pred_check_branch
        %190 = sbr.rel (%p187) target = $region32
      $region31: #{tpu_custom_call.1} parent=5 // pred_region
        %s191 = ssub.s32 %s12, 1
        %p192 = scmp.lt.s32.totalorder %s23, 1
        %s193 = scalar_select %p192, %s23, 1
        %p194 = scmp.lt.s32.totalorder %s24, 1
        %s195 = scalar_select %p194, %s24, 1
        %s196 = smul.addr %s195, 30
        %s197 = smul.addr %s193, 60
        %s198 = sadd.s32 %s196, %s197
        %s199 = smul.addr %s198, 4
        %s200 = scalar_lea.vmem %s0, %s199
        %p201 = pneg %p59
        %p202 = pneg %p56
        %p203 = scmp.lt.s32.totalorder %s22, 0
        %s204 = scalar_select %p203, %s22, 0
        %s205 = smul.addr %s204, 4
        %s206 = scalar_lea.vmem %s1, %s205
        %p207 = pneg %p85
        %p208 = pneg %p82
        %p209 = scmp.lt.s32.totalorder %s22, 0
        %s210 = scalar_select %p209, %s22, 0
        %s211 = scalar_lea.vmem %s2, %s210
        %p212 = pneg %p111
        %p213 = pneg %p108
        %p214 = pneg %p141
        %p215 = pneg %p138
        %s216 = sand.u32 %s128, 1
        %s217 = scalar_lea.sflag [#allocation3], %s216
        %s218 = sand.u32 %s128, 1
        %s219 = smul.addr %s218, 64
        %s220 = scalar_lea.vmem [#allocation2], %s219
        %p221 = scmp.lt.s32.totalorder %s23, 1
        %s222 = scalar_select %p221, %s23, 1
        %p223 = scmp.lt.s32.totalorder %s24, 1
        %s224 = scalar_select %p223, %s24, 1
        %s225 = smul.addr %s224, 30
        %s226 = smul.addr %s222, 60
        %s227 = sadd.s32 %s225, %s226
        %s228 = smul.addr %s227, 4
        %s229 = scalar_lea.vmem %s0, %s228
        %p230 = scmp.lt.s32.totalorder %s22, 0
        %s231 = scalar_select %p230, %s22, 0
        %s232 = smul.addr %s231, 4
        %s233 = scalar_lea.vmem %s1, %s232
        %p234 = scmp.lt.s32.totalorder %s22, 0
        %s235 = scalar_select %p234, %s22, 0
        %s236 = scalar_lea.vmem %s2, %s235
        %s237 = smul.u32 8, %s24
        %v239 = vld [vmem:[%s229] sm:$0xf]
        %v240 = vld [vmem:[%s229 + $0x4] sm:$0xf]
        %v241 = vld [vmem:[%s229 + $0x8] sm:$0x1]
        %v242 = vld [vmem:[%s229 + $0xc] sm:$0xf]
        %v243 = vld [vmem:[%s229 + $0x10] sm:$0xf]
        %v244 = vld [vmem:[%s229 + $0x14] sm:$0x1]
        %v245 = vld [vmem:[%s229 + $0x18] sm:$0xf]
        %v246 = vld [vmem:[%s229 + $0x1c] sm:$0xf]
        %v247 = vld [vmem:[%s229 + $0x20] sm:$0x1]
        %v248 = vld [vmem:[%s229 + $0x24] sm:$0xf]
        %v249 = vld [vmem:[%s229 + $0x28] sm:$0xf]
        %v250 = vld [vmem:[%s229 + $0x2c] sm:$0x1]
        %v251 = vld [vmem:[%s229 + $0x30] sm:$0xf]
        %v252 = vld [vmem:[%s229 + $0x34] sm:$0xf]
        %v253 = vld [vmem:[%s229 + $0x38] sm:$0x1]
        %v254 = vld [vmem:[%s229 + $0x3c] sm:$0xf]
        %v255 = vld [vmem:[%s229 + $0x40] sm:$0xf]
        %v256 = vld [vmem:[%s229 + $0x44] sm:$0x1]
        %v257 = vld [vmem:[%s229 + $0x48] sm:$0xf]
        %v258 = vld [vmem:[%s229 + $0x4c] sm:$0xf]
        %v259 = vld [vmem:[%s229 + $0x50] sm:$0x1]
        %v260 = vld [vmem:[%s229 + $0x54] sm:$0xf]
        %v261 = vld [vmem:[%s229 + $0x58] sm:$0xf]
        %v262 = vld [vmem:[%s229 + $0x5c] sm:$0x1]
        %v263 = vld [vmem:[%s229 + $0x60] sm:$0xf]
        %v264 = vld [vmem:[%s229 + $0x64] sm:$0xf]
        %v265 = vld [vmem:[%s229 + $0x68] sm:$0x1]
        %v266 = vld [vmem:[%s229 + $0x6c] sm:$0xf]
        %v267 = vld [vmem:[%s229 + $0x70] sm:$0xf]
        %v268 = vld [vmem:[%s229 + $0x74] sm:$0x1]
        %vm269 = vsmask.f32 3328
        %vm270 = vsmask.f32 7440
        %vm271 = vmor %vm269, %vm270
        %v273 = vshrl.u32 %v239, 16
        %v275 = vrot.slane %v273, 4
        %v276 = vshll.u32 %v239, 16
        %v278 = vrot.slane %v276, 5
        %v279 = vor.u32 %v275, %v278
        %v280 = vrot.slane %v279, 4
        %v282 = vshll.u32 %v240, 16
        %v284 = vrot.slane %v282, 5
        %v285 = vsel %vm271, %v280, %v284
        %v286 = vshrl.u32 %v240, 16
        %v288 = vrot.slane %v286, 4
        %v289 = vor.u32 %v288, %v284
        %v290 = vrot.slane %v289, 4
        %v292 = vshll.u32 %v241, 16
        %v294 = vrot.slane %v292, 5
        %v295 = vsel %vm271, %v290, %v294
        %v297 = vshrl.u32 %v242, 16
        %v299 = vrot.slane %v297, 4
        %v300 = vshll.u32 %v242, 16
        %v302 = vrot.slane %v300, 5
        %v303 = vor.u32 %v299, %v302
        %v304 = vrot.slane %v303, 4
        %v306 = vshll.u32 %v243, 16
        %v308 = vrot.slane %v306, 5
        %v309 = vsel %vm271, %v304, %v308
        %v310 = vshrl.u32 %v243, 16
        %v312 = vrot.slane %v310, 4
        %v313 = vor.u32 %v312, %v308
        %v314 = vrot.slane %v313, 4
        %v316 = vshll.u32 %v244, 16
        %v318 = vrot.slane %v316, 5
        %v319 = vsel %vm271, %v314, %v318
        %v321 = vshrl.u32 %v245, 16
        %v323 = vrot.slane %v321, 4
        %v324 = vshll.u32 %v245, 16
        %v326 = vrot.slane %v324, 5
        %v327 = vor.u32 %v323, %v326
        %v328 = vrot.slane %v327, 4
        %v330 = vshll.u32 %v246, 16
        %v332 = vrot.slane %v330, 5
        %v333 = vsel %vm271, %v328, %v332
        %v334 = vshrl.u32 %v246, 16
        %v336 = vrot.slane %v334, 4
        %v337 = vor.u32 %v336, %v332
        %v338 = vrot.slane %v337, 4
        %v340 = vshll.u32 %v247, 16
        %v342 = vrot.slane %v340, 5
        %v343 = vsel %vm271, %v338, %v342
        %v345 = vshrl.u32 %v248, 16
        %v347 = vrot.slane %v345, 4
        %v348 = vshll.u32 %v248, 16
        %v350 = vrot.slane %v348, 5
        %v351 = vor.u32 %v347, %v350
        %v352 = vrot.slane %v351, 4
        %v354 = vshll.u32 %v249, 16
        %v356 = vrot.slane %v354, 5
        %v357 = vsel %vm271, %v352, %v356
        %v358 = vshrl.u32 %v249, 16
        %v360 = vrot.slane %v358, 4
        %v361 = vor.u32 %v360, %v356
        %v362 = vrot.slane %v361, 4
        %v364 = vshll.u32 %v250, 16
        %v366 = vrot.slane %v364, 5
        %v367 = vsel %vm271, %v362, %v366
        %v369 = vshrl.u32 %v251, 16
        %v371 = vrot.slane %v369, 4
        %v372 = vshll.u32 %v251, 16
        %v374 = vrot.slane %v372, 5
        %v375 = vor.u32 %v371, %v374
        %v376 = vrot.slane %v375, 4
        %v378 = vshll.u32 %v252, 16
        %v380 = vrot.slane %v378, 5
        %v381 = vsel %vm271, %v376, %v380
        %v382 = vshrl.u32 %v252, 16
        %v384 = vrot.slane %v382, 4
        %v385 = vor.u32 %v384, %v380
        %v386 = vrot.slane %v385, 4
        %v388 = vshll.u32 %v253, 16
        %v390 = vrot.slane %v388, 5
        %v391 = vsel %vm271, %v386, %v390
        %v393 = vshrl.u32 %v254, 16
        %v395 = vrot.slane %v393, 4
        %v396 = vshll.u32 %v254, 16
        %v398 = vrot.slane %v396, 5
        %v399 = vor.u32 %v395, %v398
        %v400 = vrot.slane %v399, 4
        %v402 = vshll.u32 %v255, 16
        %v404 = vrot.slane %v402, 5
        %v405 = vsel %vm271, %v400, %v404
        %v406 = vshrl.u32 %v255, 16
        %v408 = vrot.slane %v406, 4
        %v409 = vor.u32 %v408, %v404
        %v410 = vrot.slane %v409, 4
        %v412 = vshll.u32 %v256, 16
        %v414 = vrot.slane %v412, 5
        %v415 = vsel %vm271, %v410, %v414
        %v417 = vshrl.u32 %v257, 16
        %v419 = vrot.slane %v417, 4
        %v420 = vshll.u32 %v257, 16
        %v422 = vrot.slane %v420, 5
        %v423 = vor.u32 %v419, %v422
        %v424 = vrot.slane %v423, 4
        %v426 = vshll.u32 %v258, 16
        %v428 = vrot.slane %v426, 5
        %v429 = vsel %vm271, %v424, %v428
        %v430 = vshrl.u32 %v258, 16
        %v432 = vrot.slane %v430, 4
        %v433 = vor.u32 %v432, %v428
        %v434 = vrot.slane %v433, 4
        %v436 = vshll.u32 %v259, 16
        %v438 = vrot.slane %v436, 5
        %v439 = vsel %vm271, %v434, %v438
        %v441 = vshrl.u32 %v260, 16
        %v443 = vrot.slane %v441, 4
        %v444 = vshll.u32 %v260, 16
        %v446 = vrot.slane %v444, 5
        %v447 = vor.u32 %v443, %v446
        %v448 = vrot.slane %v447, 4
        %v450 = vshll.u32 %v261, 16
        %v452 = vrot.slane %v450, 5
        %v453 = vsel %vm271, %v448, %v452
        %v454 = vshrl.u32 %v261, 16
        %v456 = vrot.slane %v454, 4
        %v457 = vor.u32 %v456, %v452
        %v458 = vrot.slane %v457, 4
        %v460 = vshll.u32 %v262, 16
        %v462 = vrot.slane %v460, 5
        %v463 = vsel %vm271, %v458, %v462
        %vm488 = vcmask 1042432
        %vm489 = vcmask 1046532
        %vm490 = vmor %vm488, %vm489
        %v491 = vrot.slane %v239, 5
        %v492 = vrot.slane %v491, 4
        %v493 = vrot.slane %v240, 5
        %v494 = vsel %vm490, %v492, %v493
        %v495 = vrot.slane %v493, 4
        %v496 = vrot.slane %v241, 5
        %v497 = vsel %vm490, %v495, %v496
        %v498 = vrot.slane %v242, 5
        %v499 = vrot.slane %v498, 4
        %v500 = vrot.slane %v243, 5
        %v501 = vsel %vm490, %v499, %v500
        %v502 = vrot.slane %v500, 4
        %v503 = vrot.slane %v244, 5
        %v504 = vsel %vm490, %v502, %v503
        %v505 = vrot.slane %v245, 5
        %v506 = vrot.slane %v505, 4
        %v507 = vrot.slane %v246, 5
        %v508 = vsel %vm490, %v506, %v507
        %v509 = vrot.slane %v507, 4
        %v510 = vrot.slane %v247, 5
        %v511 = vsel %vm490, %v509, %v510
        %v512 = vrot.slane %v248, 5
        %v513 = vrot.slane %v512, 4
        %v514 = vrot.slane %v249, 5
        %v515 = vsel %vm490, %v513, %v514
        %v516 = vrot.slane %v514, 4
        %v517 = vrot.slane %v250, 5
        %v518 = vsel %vm490, %v516, %v517
        %v519 = vrot.slane %v251, 5
        %v520 = vrot.slane %v519, 4
        %v521 = vrot.slane %v252, 5
        %v522 = vsel %vm490, %v520, %v521
        %v523 = vrot.slane %v521, 4
        %v524 = vrot.slane %v253, 5
        %v525 = vsel %vm490, %v523, %v524
        %v526 = vrot.slane %v254, 5
        %v527 = vrot.slane %v526, 4
        %v528 = vrot.slane %v255, 5
        %v529 = vsel %vm490, %v527, %v528
        %v530 = vrot.slane %v528, 4
        %v531 = vrot.slane %v256, 5
        %v532 = vsel %vm490, %v530, %v531
        %v533 = vrot.slane %v257, 5
        %v534 = vrot.slane %v533, 4
        %v535 = vrot.slane %v258, 5
        %v536 = vsel %vm490, %v534, %v535
        %v537 = vrot.slane %v535, 4
        %v538 = vrot.slane %v259, 5
        %v539 = vsel %vm490, %v537, %v538
        %v540 = vrot.slane %v260, 5
        %v541 = vrot.slane %v540, 4
        %v542 = vrot.slane %v261, 5
        %v543 = vsel %vm490, %v541, %v542
        %v544 = vrot.slane %v542, 4
        %v545 = vrot.slane %v262, 5
        %v546 = vsel %vm490, %v544, %v545
        %v548 = vshrl.u32 %v263, 16
        %v550 = vrot.slane %v548, 4
        %v551 = vshll.u32 %v263, 16
        %v553 = vrot.slane %v551, 5
        %v554 = vor.u32 %v550, %v553
        %v555 = vrot.slane %v554, 4
        %v557 = vshll.u32 %v264, 16
        %v559 = vrot.slane %v557, 5
        %v560 = vsel %vm271, %v555, %v559
        %v561 = vshrl.u32 %v264, 16
        %v563 = vrot.slane %v561, 4
        %v564 = vor.u32 %v563, %v559
        %v565 = vrot.slane %v564, 4
        %v567 = vshll.u32 %v265, 16
        %v569 = vrot.slane %v567, 5
        %v570 = vsel %vm271, %v565, %v569
        %v574 = vrot.slane %v263, 5
        %v575 = vrot.slane %v574, 4
        %v576 = vrot.slane %v264, 5
        %v577 = vsel %vm490, %v575, %v576
        %v578 = vrot.slane %v576, 4
        %v579 = vrot.slane %v265, 5
        %v580 = vsel %vm490, %v578, %v579
        %v582 = vshrl.u32 %v266, 16
        %v584 = vrot.slane %v582, 4
        %v585 = vshll.u32 %v266, 16
        %v587 = vrot.slane %v585, 5
        %v588 = vor.u32 %v584, %v587
        %v589 = vrot.slane %v588, 4
        %v591 = vshll.u32 %v267, 16
        %v593 = vrot.slane %v591, 5
        %v594 = vsel %vm271, %v589, %v593
        %v595 = vshrl.u32 %v267, 16
        %v597 = vrot.slane %v595, 4
        %v598 = vor.u32 %v597, %v593
        %v599 = vrot.slane %v598, 4
        %v601 = vshll.u32 %v268, 16
        %v603 = vrot.slane %v601, 5
        %v604 = vsel %vm271, %v599, %v603
        %v608 = vrot.slane %v266, 5
        %v609 = vrot.slane %v608, 4
        %v610 = vrot.slane %v267, 5
        %v611 = vsel %vm490, %v609, %v610
        %v612 = vrot.slane %v610, 4
        %v613 = vrot.slane %v268, 5
        %v614 = vsel %vm490, %v612, %v613
        %v615 = vunpack.c.l.b16 %v239
        %v616 = vunpack.c.l.b16 %v240
        %v617 = vunpack.c.l.b16 %v242
        %v618 = vunpack.c.l.b16 %v243
        %v619 = vunpack.c.l.b16 %v245
        %v620 = vunpack.c.l.b16 %v246
        %v621 = vunpack.c.l.b16 %v248
        %v622 = vunpack.c.l.b16 %v249
        %v623 = vunpack.c.l.b16 %v251
        %v624 = vunpack.c.l.b16 %v252
        %v625 = vunpack.c.l.b16 %v254
        %v626 = vunpack.c.l.b16 %v255
        %v627 = vunpack.c.l.b16 %v257
        %v628 = vunpack.c.l.b16 %v258
        %v629 = vunpack.c.l.b16 %v260
        %v630 = vunpack.c.l.b16 %v261
        %v631 = vpack.c.b16 %v616, %v615
        %v632 = vpack.c.b16 %v618, %v617
        %v633 = vpack.c.b16 %v620, %v619
        %v634 = vpack.c.b16 %v622, %v621
        %v635 = vpack.c.b16 %v624, %v623
        %v636 = vpack.c.b16 %v626, %v625
        %v637 = vpack.c.b16 %v628, %v627
        %v638 = vpack.c.b16 %v630, %v629
        %v639 = vunpack.c.l.b16 %v285
        %v640 = vunpack.c.l.b16 %v295
        %v641 = vunpack.c.l.b16 %v309
        %v642 = vunpack.c.l.b16 %v319
        %v643 = vunpack.c.l.b16 %v333
        %v644 = vunpack.c.l.b16 %v343
        %v645 = vunpack.c.l.b16 %v357
        %v646 = vunpack.c.l.b16 %v367
        %v647 = vunpack.c.l.b16 %v381
        %v648 = vunpack.c.l.b16 %v391
        %v649 = vunpack.c.l.b16 %v405
        %v650 = vunpack.c.l.b16 %v415
        %v651 = vunpack.c.l.b16 %v429
        %v652 = vunpack.c.l.b16 %v439
        %v653 = vunpack.c.l.b16 %v453
        %v654 = vunpack.c.l.b16 %v463
        %v655 = vpack.c.b16 %v640, %v639
        %v656 = vpack.c.b16 %v642, %v641
        %v657 = vpack.c.b16 %v644, %v643
        %v658 = vpack.c.b16 %v646, %v645
        %v659 = vpack.c.b16 %v648, %v647
        %v660 = vpack.c.b16 %v650, %v649
        %v661 = vpack.c.b16 %v652, %v651
        %v662 = vpack.c.b16 %v654, %v653
        %663 = vrot.lane.b32.xlu0 %v655, 8
        %v664 = vpop.permute.xlu0 %663
        %665 = vrot.lane.b32.xlu0 %v656, 8
        %v666 = vpop.permute.xlu0 %665
        %667 = vrot.lane.b32.xlu0 %v657, 8
        %v668 = vpop.permute.xlu0 %667
        %669 = vrot.lane.b32.xlu0 %v658, 8
        %v670 = vpop.permute.xlu0 %669
        %671 = vrot.lane.b32.xlu0 %v659, 8
        %v672 = vpop.permute.xlu0 %671
        %673 = vrot.lane.b32.xlu0 %v660, 8
        %v674 = vpop.permute.xlu0 %673
        %675 = vrot.lane.b32.xlu0 %v661, 8
        %v676 = vpop.permute.xlu0 %675
        %677 = vrot.lane.b32.xlu0 %v662, 8
        %v678 = vpop.permute.xlu0 %677
        %v679 = vunpack.c.l.b16 %v494
        %v680 = vunpack.c.l.b16 %v497
        %v681 = vunpack.c.l.b16 %v501
        %v682 = vunpack.c.l.b16 %v504
        %v683 = vunpack.c.l.b16 %v508
        %v684 = vunpack.c.l.b16 %v511
        %v685 = vunpack.c.l.b16 %v515
        %v686 = vunpack.c.l.b16 %v518
        %v687 = vunpack.c.l.b16 %v522
        %v688 = vunpack.c.l.b16 %v525
        %v689 = vunpack.c.l.b16 %v529
        %v690 = vunpack.c.l.b16 %v532
        %v691 = vunpack.c.l.b16 %v536
        %v692 = vunpack.c.l.b16 %v539
        %v693 = vunpack.c.l.b16 %v543
        %v694 = vunpack.c.l.b16 %v546
        %v695 = vpack.c.b16 %v680, %v679
        %v696 = vpack.c.b16 %v682, %v681
        %v697 = vpack.c.b16 %v684, %v683
        %v698 = vpack.c.b16 %v686, %v685
        %v699 = vpack.c.b16 %v688, %v687
        %v700 = vpack.c.b16 %v690, %v689
        %v701 = vpack.c.b16 %v692, %v691
        %v702 = vpack.c.b16 %v694, %v693
        %703 = vrot.lane.b32.xlu0 %v695, 16
        %v704 = vpop.permute.xlu0 %703
        %705 = vrot.lane.b32.xlu0 %v696, 16
        %v706 = vpop.permute.xlu0 %705
        %707 = vrot.lane.b32.xlu0 %v697, 16
        %v708 = vpop.permute.xlu0 %707
        %709 = vrot.lane.b32.xlu0 %v698, 16
        %v710 = vpop.permute.xlu0 %709
        %711 = vrot.lane.b32.xlu0 %v699, 16
        %v712 = vpop.permute.xlu0 %711
        %713 = vrot.lane.b32.xlu0 %v700, 16
        %v714 = vpop.permute.xlu0 %713
        %715 = vrot.lane.b32.xlu0 %v701, 16
        %v716 = vpop.permute.xlu0 %715
        %717 = vrot.lane.b32.xlu0 %v702, 16
        %v718 = vpop.permute.xlu0 %717
        %v719 = vunpack.c.l.b16 %v263
        %v720 = vunpack.c.l.b16 %v264
        %v721 = vpack.c.b16 %v720, %v719
        %722 = vrot.lane.b32.xlu0 %v632, 24
        %v723 = vpop.permute.xlu0 %722
        %724 = vrot.lane.b32.xlu0 %v633, 24
        %v725 = vpop.permute.xlu0 %724
        %726 = vrot.lane.b32.xlu0 %v634, 24
        %v727 = vpop.permute.xlu0 %726
        %728 = vrot.lane.b32.xlu0 %v635, 24
        %v729 = vpop.permute.xlu0 %728
        %730 = vrot.lane.b32.xlu0 %v636, 24
        %v731 = vpop.permute.xlu0 %730
        %732 = vrot.lane.b32.xlu0 %v637, 24
        %v733 = vpop.permute.xlu0 %732
        %734 = vrot.lane.b32.xlu0 %v638, 24
        %v735 = vpop.permute.xlu0 %734
        %736 = vrot.lane.b32.xlu0 %v721, 24
        %v737 = vpop.permute.xlu0 %736
        %v738 = vunpack.c.l.b16 %v560
        %v739 = vunpack.c.l.b16 %v570
        %v740 = vpack.c.b16 %v739, %v738
        %741 = vrot.lane.b32.xlu0 %v656, 32
        %v742 = vpop.permute.xlu0 %741
        %743 = vrot.lane.b32.xlu0 %v657, 32
        %v744 = vpop.permute.xlu0 %743
        %745 = vrot.lane.b32.xlu0 %v658, 32
        %v746 = vpop.permute.xlu0 %745
        %747 = vrot.lane.b32.xlu0 %v659, 32
        %v748 = vpop.permute.xlu0 %747
        %749 = vrot.lane.b32.xlu0 %v660, 32
        %v750 = vpop.permute.xlu0 %749
        %751 = vrot.lane.b32.xlu0 %v661, 32
        %v752 = vpop.permute.xlu0 %751
        %753 = vrot.lane.b32.xlu0 %v662, 32
        %v754 = vpop.permute.xlu0 %753
        %755 = vrot.lane.b32.xlu0 %v740, 32
        %v756 = vpop.permute.xlu0 %755
        %v757 = vunpack.c.l.b16 %v577
        %v758 = vunpack.c.l.b16 %v580
        %v759 = vpack.c.b16 %v758, %v757
        %760 = vrot.lane.b32.xlu0 %v696, 40
        %v761 = vpop.permute.xlu0 %760
        %762 = vrot.lane.b32.xlu0 %v697, 40
        %v763 = vpop.permute.xlu0 %762
        %764 = vrot.lane.b32.xlu0 %v698, 40
        %v765 = vpop.permute.xlu0 %764
        %766 = vrot.lane.b32.xlu0 %v699, 40
        %v767 = vpop.permute.xlu0 %766
        %768 = vrot.lane.b32.xlu0 %v700, 40
        %v769 = vpop.permute.xlu0 %768
        %770 = vrot.lane.b32.xlu0 %v701, 40
        %v771 = vpop.permute.xlu0 %770
        %772 = vrot.lane.b32.xlu0 %v702, 40
        %v773 = vpop.permute.xlu0 %772
        %774 = vrot.lane.b32.xlu0 %v759, 40
        %v775 = vpop.permute.xlu0 %774
        %v776 = vunpack.c.l.b16 %v266
        %v777 = vunpack.c.l.b16 %v267
        %v778 = vpack.c.b16 %v777, %v776
        %779 = vrot.lane.b32.xlu0 %v633, 48
        %v780 = vpop.permute.xlu0 %779
        %781 = vrot.lane.b32.xlu0 %v634, 48
        %v782 = vpop.permute.xlu0 %781
        %783 = vrot.lane.b32.xlu0 %v635, 48
        %v784 = vpop.permute.xlu0 %783
        %785 = vrot.lane.b32.xlu0 %v636, 48
        %v786 = vpop.permute.xlu0 %785
        %787 = vrot.lane.b32.xlu0 %v637, 48
        %v788 = vpop.permute.xlu0 %787
        %789 = vrot.lane.b32.xlu0 %v638, 48
        %v790 = vpop.permute.xlu0 %789
        %791 = vrot.lane.b32.xlu0 %v721, 48
        %v792 = vpop.permute.xlu0 %791
        %793 = vrot.lane.b32.xlu0 %v778, 48
        %v794 = vpop.permute.xlu0 %793
        %v795 = vunpack.c.l.b16 %v594
        %v796 = vunpack.c.l.b16 %v604
        %v797 = vpack.c.b16 %v796, %v795
        %798 = vrot.lane.b32.xlu0 %v657, 56
        %v799 = vpop.permute.xlu0 %798
        %800 = vrot.lane.b32.xlu0 %v658, 56
        %v801 = vpop.permute.xlu0 %800
        %802 = vrot.lane.b32.xlu0 %v659, 56
        %v803 = vpop.permute.xlu0 %802
        %804 = vrot.lane.b32.xlu0 %v660, 56
        %v805 = vpop.permute.xlu0 %804
        %806 = vrot.lane.b32.xlu0 %v661, 56
        %v807 = vpop.permute.xlu0 %806
        %808 = vrot.lane.b32.xlu0 %v662, 56
        %v809 = vpop.permute.xlu0 %808
        %810 = vrot.lane.b32.xlu0 %v740, 56
        %v811 = vpop.permute.xlu0 %810
        %812 = vrot.lane.b32.xlu0 %v797, 56
        %v813 = vpop.permute.xlu0 %812
        %v814 = vunpack.c.l.b16 %v611
        %v815 = vunpack.c.l.b16 %v614
        %v816 = vpack.c.b16 %v815, %v814
        %817 = vrot.lane.b32.xlu0 %v697, 64
        %v818 = vpop.permute.xlu0 %817
        %819 = vrot.lane.b32.xlu0 %v698, 64
        %v820 = vpop.permute.xlu0 %819
        %821 = vrot.lane.b32.xlu0 %v699, 64
        %v822 = vpop.permute.xlu0 %821
        %823 = vrot.lane.b32.xlu0 %v700, 64
        %v824 = vpop.permute.xlu0 %823
        %825 = vrot.lane.b32.xlu0 %v701, 64
        %v826 = vpop.permute.xlu0 %825
        %827 = vrot.lane.b32.xlu0 %v702, 64
        %v828 = vpop.permute.xlu0 %827
        %829 = vrot.lane.b32.xlu0 %v759, 64
        %v830 = vpop.permute.xlu0 %829
        %831 = vrot.lane.b32.xlu0 %v816, 64
        %v832 = vpop.permute.xlu0 %831
        %vm833 = vcmask 64512
        %v836 = vsel %vm833, %v631, %v664
        %v839 = vsel %vm833, %v632, %v666
        %v842 = vsel %vm833, %v633, %v668
        %v845 = vsel %vm833, %v634, %v670
        %v848 = vsel %vm833, %v635, %v672
        %v851 = vsel %vm833, %v636, %v674
        %v854 = vsel %vm833, %v637, %v676
        %v857 = vsel %vm833, %v638, %v678
        %vm858 = vcmask 130048
        %v860 = vsel %vm858, %v836, %v704
        %v862 = vsel %vm858, %v839, %v706
        %v864 = vsel %vm858, %v842, %v708
        %v866 = vsel %vm858, %v845, %v710
        %v868 = vsel %vm858, %v848, %v712
        %v870 = vsel %vm858, %v851, %v714
        %v872 = vsel %vm858, %v854, %v716
        %v874 = vsel %vm858, %v857, %v718
        %vm875 = vcmask 195584
        %v877 = vsel %vm875, %v860, %v723
        %v879 = vsel %vm875, %v862, %v725
        %v881 = vsel %vm875, %v864, %v727
        %v883 = vsel %vm875, %v866, %v729
        %v885 = vsel %vm875, %v868, %v731
        %v887 = vsel %vm875, %v870, %v733
        %v889 = vsel %vm875, %v872, %v735
        %v891 = vsel %vm875, %v874, %v737
        %vm892 = vcmask 261120
        %v894 = vsel %vm892, %v877, %v742
        %v896 = vsel %vm892, %v879, %v744
        %v898 = vsel %vm892, %v881, %v746
        %v900 = vsel %vm892, %v883, %v748
        %v902 = vsel %vm892, %v885, %v750
        %v904 = vsel %vm892, %v887, %v752
        %v906 = vsel %vm892, %v889, %v754
        %v908 = vsel %vm892, %v891, %v756
        %vm909 = vcmask 326656
        %v911 = vsel %vm909, %v894, %v761
        %v913 = vsel %vm909, %v896, %v763
        %v915 = vsel %vm909, %v898, %v765
        %v917 = vsel %vm909, %v900, %v767
        %v919 = vsel %vm909, %v902, %v769
        %v921 = vsel %vm909, %v904, %v771
        %v923 = vsel %vm909, %v906, %v773
        %v925 = vsel %vm909, %v908, %v775
        %vm926 = vcmask 392192
        %v928 = vsel %vm926, %v911, %v780
        %v930 = vsel %vm926, %v913, %v782
        %v932 = vsel %vm926, %v915, %v784
        %v934 = vsel %vm926, %v917, %v786
        %v936 = vsel %vm926, %v919, %v788
        %v938 = vsel %vm926, %v921, %v790
        %v940 = vsel %vm926, %v923, %v792
        %v942 = vsel %vm926, %v925, %v794
        %vm943 = vcmask 457728
        %v945 = vsel %vm943, %v928, %v799
        %v947 = vsel %vm943, %v930, %v801
        %v949 = vsel %vm943, %v932, %v803
        %v951 = vsel %vm943, %v934, %v805
        %v953 = vsel %vm943, %v936, %v807
        %v955 = vsel %vm943, %v938, %v809
        %v957 = vsel %vm943, %v940, %v811
        %v959 = vsel %vm943, %v942, %v813
        %vm960 = vcmask 523264
        %v962 = vsel %vm960, %v945, %v818
        %v964 = vsel %vm960, %v947, %v820
        %v966 = vsel %vm960, %v949, %v822
        %v968 = vsel %vm960, %v951, %v824
        %v970 = vsel %vm960, %v953, %v826
        %v972 = vsel %vm960, %v955, %v828
        %v974 = vsel %vm960, %v957, %v830
        %v976 = vsel %vm960, %v959, %v832
        %v977 = vld [vmem:[%s233] sm:$0xf]
        %v978 = vld [vmem:[%s233 + $0x4] sm:$0xf]
        %v979 = vld [vmem:[%s233 + $0x8] sm:$0xf]
        %v980 = vld [vmem:[%s233 + $0xc] sm:$0xf]
        %v981 = vld [vmem:[%s233 + $0x10] sm:$0xf]
        %v982 = vld [vmem:[%s233 + $0x14] sm:$0xf]
        %v983 = vld [vmem:[%s233 + $0x18] sm:$0xf]
        %v984 = vld [vmem:[%s233 + $0x1c] sm:$0xf]
        %v985 = vld [vmem:[%s233 + $0x20] sm:$0xf]
        %v986 = vld [vmem:[%s236] sm:$0x1]
        %v988 = vlaneseq
        %v989 = vshrl.u32 %v988, 7
        %v990 = vsub.s32 0, %v989
        %v991 = vrot.slane %v986, %v990
        %v1002 = vunpack.c.l.b16 %v977
        %v1003 = vunpack.c.l.b16 %v978
        %v1004 = vunpack.c.l.b16 %v979
        %v1005 = vunpack.c.l.b16 %v980
        %v1006 = vunpack.c.l.b16 %v981
        %v1007 = vunpack.c.l.b16 %v982
        %v1008 = vunpack.c.l.b16 %v983
        %v1009 = vunpack.c.l.b16 %v984
        %v1010 = vunpack.c.l.b16 %v985
        %v1011 = vpack.c.b16 %v1003, %v1002
        %v1012 = vpack.c.b16 %v1005, %v1004
        %v1013 = vpack.c.b16 %v1007, %v1006
        %v1014 = vpack.c.b16 %v1009, %v1008
        %v1015 = vpack.c.b16 %v1010, %v1010
        %vm1020 = vcmask 588800
        %v1021 = vsel %vm1020, %v962, 0
        %v1023 = vsel %vm1020, %v964, 0
        %v1025 = vsel %vm1020, %v966, 0
        %v1027 = vsel %vm1020, %v968, 0
        %v1029 = vsel %vm1020, %v970, 0
        %v1031 = vsel %vm1020, %v972, 0
        %v1033 = vsel %vm1020, %v974, 0
        %v1035 = vsel %vm1020, %v976, 0
        %vm1037 = vcmask 1043456
        %v1039 = vsel %vm1037, %v1015, 0
        %1041 = vmatprep.subr.bf16.mxu0 0
        %1042 = vmatpush1.bf16.msra.mxu0 %v1011
        %1043 = vmatprep.subr.bf16.mxu0 0
        %1044 = vmatpush1.bf16.msra.mxu0 %v1012
        %1045 = vmatprep.subr.bf16.mxu0 0
        %1046 = vmatpush1.bf16.msra.mxu0 %v1013
        %1047 = vmatprep.subr.bf16.mxu0 0
        %1048 = vmatpush1.bf16.msra.mxu0 %v1014
        %1049 = vmatprep.subr.bf16.mxu0 0
        %1050 = vmatpush1.bf16.msra.mxu0 %v1039
        %1051 = vmatprep.subr.bf16.mxu0 0
        %1052 = vmatpush1.bf16.msra.mxu0 0
        %1053 = vmatprep.subr.bf16.mxu0 0
        %1054 = vmatpush1.bf16.msra.mxu0 0
        %1055 = vmatprep.subr.bf16.mxu0 0
        %1056 = vmatpush1.bf16.msra.mxu0 0
        %1057 = vmatprep.subr.bf16.mxu0 0
        %1058 = vmatpush1.bf16.msra.mxu0 0
        %1059 = vmatprep.subr.bf16.mxu0 0
        %1060 = vmatpush1.bf16.msra.mxu0 0
        %1061 = vmatprep.subr.bf16.mxu0 0
        %1062 = vmatpush1.bf16.msra.mxu0 0
        %1063 = vmatprep.subr.bf16.mxu0 0
        %1064 = vmatpush1.bf16.msra.mxu0 0
        %1065 = vmatprep.subr.bf16.mxu0 0
        %1066 = vmatpush1.bf16.msra.mxu0 0
        %1067 = vmatprep.subr.bf16.mxu0 0
        %1068 = vmatpush1.bf16.msra.mxu0 0
        %1069 = vmatprep.subr.bf16.mxu0 0
        %1070 = vmatpush1.bf16.msra.mxu0 0
        %1071 = vmatprep.subr.bf16.mxu0 0
        %1072 = vmatpush1.bf16.msra.mxu0 0
        %1073 = vmatprep.mubr.bf16.mxu0 0
        %1074 = vmatmul.mubr.bf16.gmra.mrb[0].mxu0 %v1021
        %v1075 = vpop.f32.mrb[0].mxu0
        %v1076 = vadd.f32 %v991, %v1075
        %v1077 = vpop.f32.mrb[0].mxu0
        %v1078 = vpop.f32.mrb[0].mxu0
        %v1079 = vadd.f32 %v991, %v1078
        %v1080 = vpop.f32.mrb[0].mxu0
        %1081 = vmatprep.mubr.bf16.mxu0 0
        %1082 = vmatmul.mubr.bf16.gmra.mrb[0].mxu0 %v1023
        %v1083 = vpop.f32.mrb[0].mxu0
        %v1084 = vadd.f32 %v991, %v1083
        %v1085 = vpop.f32.mrb[0].mxu0
        %v1086 = vpop.f32.mrb[0].mxu0
        %v1087 = vadd.f32 %v991, %v1086
        %v1088 = vpop.f32.mrb[0].mxu0
        %1089 = vmatprep.mubr.bf16.mxu0 0
        %1090 = vmatmul.mubr.bf16.gmra.mrb[0].mxu0 %v1025
        %v1091 = vpop.f32.mrb[0].mxu0
        %v1092 = vadd.f32 %v991, %v1091
        %v1093 = vpop.f32.mrb[0].mxu0
        %v1094 = vpop.f32.mrb[0].mxu0
        %v1095 = vadd.f32 %v991, %v1094
        %v1096 = vpop.f32.mrb[0].mxu0
        %1097 = vmatprep.mubr.bf16.mxu0 0
        %1098 = vmatmul.mubr.bf16.gmra.mrb[0].mxu0 %v1027
        %v1099 = vpop.f32.mrb[0].mxu0
        %v1100 = vadd.f32 %v991, %v1099
        %v1101 = vpop.f32.mrb[0].mxu0
        %v1102 = vpop.f32.mrb[0].mxu0
        %v1103 = vadd.f32 %v991, %v1102
        %v1104 = vpop.f32.mrb[0].mxu0
        %1105 = vmatprep.mubr.bf16.mxu0 0
        %1106 = vmatmul.mubr.bf16.gmra.mrb[0].mxu0 %v1029
        %v1107 = vpop.f32.mrb[0].mxu0
        %v1108 = vadd.f32 %v991, %v1107
        %v1109 = vpop.f32.mrb[0].mxu0
        %v1110 = vpop.f32.mrb[0].mxu0
        %v1111 = vadd.f32 %v991, %v1110
        %v1112 = vpop.f32.mrb[0].mxu0
        %1113 = vmatprep.mubr.bf16.mxu0 0
        %1114 = vmatmul.mubr.bf16.gmra.mrb[0].mxu0 %v1031
        %v1115 = vpop.f32.mrb[0].mxu0
        %v1116 = vadd.f32 %v991, %v1115
        %v1117 = vpop.f32.mrb[0].mxu0
        %v1118 = vpop.f32.mrb[0].mxu0
        %v1119 = vadd.f32 %v991, %v1118
        %v1120 = vpop.f32.mrb[0].mxu0
        %1121 = vmatprep.mubr.bf16.mxu0 0
        %1122 = vmatmul.mubr.bf16.gmra.mrb[0].mxu0 %v1033
        %v1123 = vpop.f32.mrb[0].mxu0
        %v1124 = vadd.f32 %v991, %v1123
        %v1125 = vpop.f32.mrb[0].mxu0
        %v1126 = vpop.f32.mrb[0].mxu0
        %v1127 = vadd.f32 %v991, %v1126
        %v1128 = vpop.f32.mrb[0].mxu0
        %1129 = vmatprep.mubr.bf16.mxu0 0
        %1130 = vmatmul.mubr.bf16.gmra.mrb[0].mxu0 %v1035
        %v1131 = vpop.f32.mrb[0].mxu0
        %v1132 = vadd.f32 %v991, %v1131
        %v1133 = vpop.f32.mrb[0].mxu0
        %v1134 = vpop.f32.mrb[0].mxu0
        %v1135 = vadd.f32 %v991, %v1134
        %v1136 = vpop.f32.mrb[0].mxu0
        %1137 = vdwg.mxu0
        %v1138 = vmax.f32 %v1076, 0.0
        %v1139 = vmax.f32 %v1079, 0.0
        %v1140 = vmax.f32 %v1084, 0.0
        %v1141 = vmax.f32 %v1087, 0.0
        %v1142 = vmax.f32 %v1092, 0.0
        %v1143 = vmax.f32 %v1095, 0.0
        %v1144 = vmax.f32 %v1100, 0.0
        %v1145 = vmax.f32 %v1103, 0.0
        %v1146 = vmax.f32 %v1108, 0.0
        %v1147 = vmax.f32 %v1111, 0.0
        %v1148 = vmax.f32 %v1116, 0.0
        %v1149 = vmax.f32 %v1119, 0.0
        %v1150 = vmax.f32 %v1124, 0.0
        %v1151 = vmax.f32 %v1127, 0.0
        %v1152 = vmax.f32 %v1132, 0.0
        %v1153 = vmax.f32 %v1135, 0.0
        %v1154 = vpack.c.bf16 %v1139, %v1138
        %v1155 = vpack.c.bf16 %v1141, %v1140
        %v1156 = vpack.c.bf16 %v1143, %v1142
        %v1157 = vpack.c.bf16 %v1145, %v1144
        %v1158 = vpack.c.bf16 %v1147, %v1146
        %v1159 = vpack.c.bf16 %v1149, %v1148
        %v1160 = vpack.c.bf16 %v1151, %v1150
        %v1161 = vpack.c.bf16 %v1153, %v1152
        %v1170 = vunpack.c.l.b16 %v1154
        %v1171 = vunpack.c.h.b16 %v1154
        %v1172 = vunpack.c.l.b16 %v1155
        %v1173 = vunpack.c.h.b16 %v1155
        %v1174 = vunpack.c.l.b16 %v1156
        %v1175 = vunpack.c.h.b16 %v1156
        %v1176 = vunpack.c.l.b16 %v1157
        %v1177 = vunpack.c.h.b16 %v1157
        %v1178 = vunpack.c.l.b16 %v1158
        %v1179 = vunpack.c.h.b16 %v1158
        %v1180 = vunpack.c.l.b16 %v1159
        %v1181 = vunpack.c.h.b16 %v1159
        %v1182 = vunpack.c.l.b16 %v1160
        %v1183 = vunpack.c.h.b16 %v1160
        %v1184 = vunpack.c.l.b16 %v1161
        %v1185 = vunpack.c.h.b16 %v1161
        %v1186 = vpack.c.b16 %v1170, %v1170
        %v1187 = vpack.c.b16 %v1171, %v1171
        %v1188 = vpack.c.b16 %v1172, %v1172
        %v1189 = vpack.c.b16 %v1173, %v1173
        %v1190 = vpack.c.b16 %v1174, %v1174
        %v1191 = vpack.c.b16 %v1175, %v1175
        %v1192 = vpack.c.b16 %v1176, %v1176
        %v1193 = vpack.c.b16 %v1177, %v1177
        %v1194 = vpack.c.b16 %v1178, %v1178
        %v1195 = vpack.c.b16 %v1179, %v1179
        %v1196 = vpack.c.b16 %v1180, %v1180
        %v1197 = vpack.c.b16 %v1181, %v1181
        %v1198 = vpack.c.b16 %v1182, %v1182
        %v1199 = vpack.c.b16 %v1183, %v1183
        %v1200 = vpack.c.b16 %v1184, %v1184
        %v1201 = vpack.c.b16 %v1185, %v1185
        %vm1218 = vcmask 519168
        %1219 = vst.msk [vmem:[%s220] sm:$0xf] %vm1218, %v1186
        %1220 = vst.msk [vmem:[%s220 + $0x4] sm:$0xf] %vm1218, %v1187
        %1221 = vst.msk [vmem:[%s220 + $0x8] sm:$0xf] %vm1218, %v1188
        %1222 = vst.msk [vmem:[%s220 + $0xc] sm:$0xf] %vm1218, %v1189
        %1223 = vst.msk [vmem:[%s220 + $0x10] sm:$0xf] %vm1218, %v1190
        %1224 = vst.msk [vmem:[%s220 + $0x14] sm:$0xf] %vm1218, %v1191
        %1225 = vst.msk [vmem:[%s220 + $0x18] sm:$0xf] %vm1218, %v1192
        %1226 = vst.msk [vmem:[%s220 + $0x1c] sm:$0xf] %vm1218, %v1193
        %1227 = vst.msk [vmem:[%s220 + $0x20] sm:$0xf] %vm1218, %v1194
        %1228 = vst.msk [vmem:[%s220 + $0x24] sm:$0xf] %vm1218, %v1195
        %1229 = vst.msk [vmem:[%s220 + $0x28] sm:$0xf] %vm1218, %v1196
        %1230 = vst.msk [vmem:[%s220 + $0x2c] sm:$0xf] %vm1218, %v1197
        %1231 = vst.msk [vmem:[%s220 + $0x30] sm:$0xf] %vm1218, %v1198
        %1232 = vst.msk [vmem:[%s220 + $0x34] sm:$0xf] %vm1218, %v1199
        %1233 = vst.msk [vmem:[%s220 + $0x38] sm:$0xf] %vm1218, %v1200
        %1234 = vst.msk [vmem:[%s220 + $0x3c] sm:$0xf] %vm1218, %v1201
        %s1235 = sand.u32 %s128, 1
        %s1236 = scalar_lea.sflag [#allocation3], %s1235
        %s1237 = sand.u32 %s128, 1
        %s1238 = smul.addr %s1237, 64
        %s1239 = scalar_lea.vmem [#allocation2], %s1238
        // Predicated region
        $region33: #{tpu_custom_call.1} parent=31 // pred_check
          %p1240 = pneg %p138
        $region34: #{tpu_custom_call.1} parent=31 // pred_check_branch
          %1242 = sbr.rel (%p1240) target = $region36
        $region35: #{tpu_custom_call.1} parent=31 // pred_region
          %s1243 = smul.u32 8, %s24
          %s1245 = ssub.s32 1024, 1024
          %1246 = vsyncadd %s1236, %s1245
          %s1247 = smul.addr %s1243, 2
          %s1248 = sadd.s32 %s22, %s1247
          %s1249 = smul.addr %s23, 32
          %s1250 = sadd.s32 %s1248, %s1249
          %s1251 = smul.addr %s1250, 64
          %s1252 = scalar_lea.hbm %s3, %s1251
          %s1253 = sshll.u32 %s1239, 4
          %s1254 = int_to_ptr.vmem [resolvable:$true] %s1253
          %1259 = dma.vmem_to_hbm [thread:$0]  %s1254, 1024, %s1252, %s1236, 64, 64, 4
        $region36: #{tpu_custom_call.1} parent=31 // pred_fallthru
          _
      $region32: #{tpu_custom_call.1} parent=5 // pred_fallthru
        _
      %p1260 = scmp.le.s32.totalorder 2, %s12
      // Predicated region
      $region37: #{tpu_custom_call.1} parent=5 // pred_check
        %p1261 = pneg %p1260
      $region38: #{tpu_custom_call.1} parent=5 // pred_check_branch
        %1263 = sbr.rel (%p1261) target = $region40
      $region39: #{tpu_custom_call.1} parent=5 // pred_region
        %s1264 = ssub.s32 %s12, 2
        // Predicated region
        $region41: #{tpu_custom_call.1} parent=39 // pred_check
          %p1265 = pneg %p144
        $region42: #{tpu_custom_call.1} parent=39 // pred_check_branch
          %1267 = sbr.rel (%p1265) target = $region44
        $region43: #{tpu_custom_call.1} parent=39 // pred_region
          %s1268 = sand.u32 %s129, 1
          %s1269 = scalar_lea.sflag [#allocation3], %s1268
          %s1270 = sand.u32 %s129, 1
          %s1271 = smul.addr %s1270, 64
          %s1272 = scalar_lea.vmem [#allocation2], %s1271
          %1273 = dma.done %s1269, 1024
        $region44: #{tpu_custom_call.1} parent=39 // pred_fallthru
          _
      $region40: #{tpu_custom_call.1} parent=5 // pred_fallthru
        _
    $region6: #{tpu_custom_call.1} parent=1 // loop_footer
      %s16 = sadd.s32 1, %s12
    $region7: #{tpu_custom_call.1} parent=1 // loop_footer_branch
      %11 = sbr.rel target = $region3
    $region8: #{tpu_custom_call.1} parent=1 // loop_exit
      _
    %1274 = vsyncpa [#allocation3], 1
    %s1275 = scalar_lea.sflag [#allocation3], 1
    %1276 = vsyncpa %s1275, 1

</llo_original>
